<compile_context>
chip_gen: v5e
topology: v5e:2x2
jax: 0.10.0
libtpu: 0.0.40
codegen_flags: <defaults>
</compile_context>

<pallas_src>
import functools

import jax
import jax.numpy as jnp
from jax.experimental import pallas as pl
from jax.experimental.pallas import tpu as pltpu


def _normalize_kernel(x_ref, mean_ref, inv_sd_ref, o_ref, *, row_tile: int):
    """o = (x - mean) * inv_sd for one (row_tile, lane_tile) data tile.

    x_ref / o_ref:        (row_tile, lane_tile) tile of the (B*C, H*W) stream.
    mean_ref / inv_sd_ref: full (rows_pad, 1) f32 columns, resident in VMEM; the rows that
                           belong to this tile are selected with an aligned dynamic sublane
                           slice and broadcast across the lane axis by the VPU.
    """
    i = pl.program_id(0)
    r0 = pl.multiple_of(i * row_tile, row_tile)
    mean = mean_ref[pl.ds(r0, row_tile), :]       # (row_tile, 1) f32
    inv_sd = inv_sd_ref[pl.ds(r0, row_tile), :]   # (row_tile, 1) f32
    x = x_ref[...].astype(jnp.float32)
    o_ref[...] = ((x - mean) * inv_sd).astype(o_ref.dtype)


def _tile_budget():
    """Return (per-tile input bytes, vmem_limit_bytes) chosen per TPU generation."""
    try:
        cap = pltpu.get_tpu_info().vmem_capacity_bytes
    except Exception:
        cap = None
    if cap is not None and cap >= 100 * 1024 * 1024:
        # v5e / v6e: 128 MiB physical VMEM -> larger steps further amortize the ~0.35 us/step
        # pipeline overhead.  (in + out) x 2 buffers of ~8-16 MiB stays well under 96 MiB.
        return 8 * 1024 * 1024, 96 * 1024 * 1024
    # v7x (64 MiB physical, 32 MiB default scoped) or unknown chip: conservative budget.
    # (in + out) x 2 buffers + resident stat columns <= ~40 MiB under the 48 MiB limit.
    return 4 * 1024 * 1024, 48 * 1024 * 1024


def normalize_layer(
    x: jax.Array,
    means: jax.Array,
    sds: jax.Array,
    *,
    tile_bytes: int | None = None,
    vmem_limit_bytes: int | None = None,
) -> jax.Array:
    """(x - means[c]) / sds[c] for NCHW input x and per-channel means/sds of shape (C,)."""
    B, C, H, W = x.shape
    rows = B * C
    lanes = H * W

    auto_tile_bytes, auto_vmem = _tile_budget()
    tile_bytes = auto_tile_bytes if tile_bytes is None else tile_bytes
    vmem_limit_bytes = auto_vmem if vmem_limit_bytes is None else vmem_limit_bytes

    in_dtype = x.dtype
    out_dtype = jnp.promote_types(in_dtype, jnp.float32)  # matches torch type promotion
    itemsize = jnp.dtype(in_dtype).itemsize

    # ---- dtype-aware tile sizing: constant bytes per step, aligned to the packed vreg tile.
    sub_align = max(8, 32 // max(itemsize, 1))            # 8 f32, 16 bf16, 32 int8/fp8
    tile_elems = max(sub_align * 128, tile_bytes // itemsize)

    # Lane axis as wide as possible (lane-dense, unmasked stores), keeping >= sub_align rows.
    max_lt = max(128, (tile_elems // sub_align) // 128 * 128)
    lt = lanes if lanes <= max_lt else max_lt             # full extent or 128-aligned

    rt_budget = max(sub_align, (tile_elems // lt) // sub_align * sub_align)
    rt = rows if rows <= rt_budget else rt_budget         # full extent or sub_align-aligned

    grid = (pl.cdiv(rows, rt), pl.cdiv(lanes, lt))        # boundary blocks are masked
    rows_pad = grid[0] * rt                               # so in-kernel row slices stay in-bounds

    # ---- per-(b, c) statistics as fully resident f32 columns (mean and 1/sd). ----
    means_f32 = jnp.asarray(means, jnp.float32).reshape(-1)
    inv_sds_f32 = 1.0 / jnp.asarray(sds, jnp.float32).reshape(-1)
    mean_rows = jnp.tile(means_f32, B)                    # row b*C + c -> means[c]
    inv_rows = jnp.tile(inv_sds_f32, B)
    if rows_pad > rows:
        pad = rows_pad - rows
        mean_rows = jnp.pad(mean_rows, (0, pad))
        inv_rows = jnp.pad(inv_rows, (0, pad))
    mean_col = mean_rows.reshape(rows_pad, 1)
    inv_col = inv_rows.reshape(rows_pad, 1)

    # Lane-dense 2D view of the input.
    x2d = x.reshape(rows, lanes)

    tile_spec = pl.BlockSpec((rt, lt), lambda i, j: (i, j))
    # Full-extent stat columns, constant index_map -> fetched into VMEM once for the whole grid.
    col_spec = pl.BlockSpec((rows_pad, 1), lambda i, j: (0, 0))

    out2d = pl.pallas_call(
        functools.partial(_normalize_kernel, row_tile=rt),
        out_shape=jax.ShapeDtypeStruct((rows, lanes), out_dtype),
        grid=grid,
        in_specs=[tile_spec, col_spec, col_spec],
        out_specs=tile_spec,
        compiler_params=pltpu.CompilerParams(
            # Purely elementwise: both grid axes independent -> megacore-shardable on v7x.
            dimension_semantics=("parallel", "parallel"),
            vmem_limit_bytes=vmem_limit_bytes,
        ),
    )(x2d, mean_col, inv_col)

    return out2d.reshape(B, C, H, W)


if __name__ == "__main__":
    key = jax.random.PRNGKey(0)

    def _ref(x, means, sds):
        m = jnp.asarray(means, jnp.float32)[None, :, None, None]
        s = jnp.asarray(sds, jnp.float32)[None, :, None, None]
        return (x.astype(jnp.float32) - m) / s

    # CIFAR-like per-channel statistics.
    means4 = jnp.array([0.4914, 0.4822, 0.4465, 0.5000], dtype=jnp.float32)
    sds4 = jnp.array([0.2023, 0.1994, 0.2010, 0.2500], dtype=jnp.float32)
    means3 = jnp.array([0.4850, 0.4560, 0.4060], dtype=jnp.float32)
    sds3 = jnp.array([0.2290, 0.2240, 0.2250], dtype=jnp.float32)

    # 1) Basic case: f32, small shape, single full-extent tile.
    B, C, H, W = 2, 4, 16, 16
    x1 = jax.random.normal(key, (B, C, H, W), dtype=jnp.float32)
    out1 = jax.block_until_ready(normalize_layer(x1, means4, sds4))
    assert out1.shape == (B, C, H, W) and out1.dtype == jnp.float32
    assert jnp.allclose(out1, _ref(x1, means4, sds4), atol=1e-5, rtol=1e-5)

    # 2) Awkward shape with a tiny forced tile budget: exercises the pl.cdiv grid with masked
    #    boundary blocks on BOTH axes, stat-column padding, and the in-kernel row slice at i > 0.
    k1, k2 = jax.random.split(key)
    x2 = jax.random.normal(k1, (4, 3, 15, 20), dtype=jnp.float32)
    out2 = jax.block_until_ready(normalize_layer(x2, means3, sds3, tile_bytes=4096))
    assert out2.shape == (4, 3, 15, 20)
    assert jnp.allclose(out2, _ref(x2, means3, sds3), atol=1e-5, rtol=1e-5)

    # 3) bf16 input: f32 compute, output promoted to f32 (torch promotion semantics).
    x3 = jax.random.normal(k2, (B, C, H, W), dtype=jnp.bfloat16)
    out3 = jax.block_until_ready(normalize_layer(x3, means4, sds4))
    assert out3.dtype == jnp.float32
    assert jnp.allclose(out3, _ref(x3, means4, sds4), atol=1e-5, rtol=1e-5)

    print("KERNEL_OK")
</pallas_src>

<mosaic_0001>
module attributes {stable_mosaic.version = 11 : i64} {
  func.func @_normalize_kernel(%arg0: i32, %arg1: i32, %arg2: memref<8x256xf32, #tpu.memory_space<vmem>>, %arg3: memref<8x1xf32, #tpu.memory_space<vmem>>, %arg4: memref<8x1xf32, #tpu.memory_space<vmem>>, %arg5: memref<8x256xf32, #tpu.memory_space<vmem>>) attributes {dimension_semantics = [#tpu.dimension_semantics<parallel>, #tpu.dimension_semantics<parallel>], iteration_bounds = array<i64: 1, 1>, scalar_prefetch = 0 : i64, scratch_operands = 0 : i64, tpu.core_type = #tpu.core_type<tc>, window_params = [{transform_indices = @transform_0, window_bounds = array<i64: 8, 256>}, {pipeline_mode = #tpu.pipeline_mode<synchronous>, transform_indices = @transform_1, window_bounds = array<i64: 8, 1>}, {pipeline_mode = #tpu.pipeline_mode<synchronous>, transform_indices = @transform_2, window_bounds = array<i64: 8, 1>}, {transform_indices = @transform_3, window_bounds = array<i64: 8, 256>}]} {
    %c8_i32 = arith.constant 8 : i32
    %0 = arith.muli %arg0, %c8_i32 : i32
    %1 = tpu.assume_multiple %0, 8 : i32
    %2 = arith.index_cast %1 : i32 to index
    %c0 = arith.constant 0 : index
    %3 = vector.load %arg3[%2, %c0] : memref<8x1xf32, #tpu.memory_space<vmem>>, vector<8x1xf32>
    %4 = arith.index_cast %1 : i32 to index
    %c0_0 = arith.constant 0 : index
    %5 = vector.load %arg4[%4, %c0_0] : memref<8x1xf32, #tpu.memory_space<vmem>>, vector<8x1xf32>
    %c0_1 = arith.constant 0 : index
    %c0_2 = arith.constant 0 : index
    %6 = vector.load %arg2[%c0_1, %c0_2] : memref<8x256xf32, #tpu.memory_space<vmem>>, vector<8x256xf32>
    %7 = vector.broadcast %3 : vector<8x1xf32> to vector<8x256xf32>
    %8 = arith.subf %6, %7 : vector<8x256xf32>
    %9 = vector.broadcast %5 : vector<8x1xf32> to vector<8x256xf32>
    %10 = arith.mulf %8, %9 : vector<8x256xf32>
    %c0_3 = arith.constant 0 : index
    %c0_4 = arith.constant 0 : index
    %11 = vector.load %arg5[%c0_3, %c0_4] : memref<8x256xf32, #tpu.memory_space<vmem>>, vector<8x256xf32>
    tpu.vector_store %arg5[%c0_3, %c0_4], %10 {strides = array<i32>} : memref<8x256xf32, #tpu.memory_space<vmem>>, vector<8x256xf32>,
    return
  }
  func.func @transform_0(%arg0: i32, %arg1: i32) -> (i32, i32) {
    %c0_i32 = arith.constant 0 : i32
    return %arg0, %arg1 : i32, i32
  }
  func.func @transform_1(%arg0: i32, %arg1: i32) -> (i32, i32) {
    %c0_i32 = arith.constant 0 : i32
    %c0_i32_0 = arith.constant 0 : i32
    %c0_i32_1 = arith.constant 0 : i32
    return %c0_i32, %c0_i32_0 : i32, i32
  }
  func.func @transform_2(%arg0: i32, %arg1: i32) -> (i32, i32) {
    %c0_i32 = arith.constant 0 : i32
    %c0_i32_0 = arith.constant 0 : i32
    %c0_i32_1 = arith.constant 0 : i32
    return %c0_i32, %c0_i32_0 : i32, i32
  }
  func.func @transform_3(%arg0: i32, %arg1: i32) -> (i32, i32) {
    %c0_i32 = arith.constant 0 : i32
    return %arg0, %arg1 : i32, i32
  }
}

</mosaic_0001>

<llo_original>
// kernel: tpu_custom_call.1
$region0: #{tpu_custom_call.1}
  #allocation0 [shape = 'u32[]', space=smem, size = 0x4, offset = 0x4, fixed_abs, tag = 'smem constant byte address 0x4 - core index']
  #allocation1 [shape = 'u32[72,128]{1,0:T(1,128)}', space=vmem, size = 0x9000, scoped, tag = 'internal scratch']
  %s0 = inlined_call_operand.vmem [shape: f32[8,256], index: 0, kind: input, shape index: {}]
  %s1 = inlined_call_operand.vmem [shape: f32[8,1], index: 1, kind: input, shape index: {}]
  %s2 = inlined_call_operand.vmem [shape: f32[8,1], index: 2, kind: input, shape index: {}]
  %s3 = inlined_call_operand.hbm [shape: f32[8,256], index: 3, kind: output, shape index: {}]
  %s4 = sld [smem:[#allocation0]]
  $region22: #{tpu_custom_call.1} parent=0
    _
  %s6 = ssub.s32 1, %s4
  %s7 = scalar_select 0, %s6, %s4
  $region1: #{tpu_custom_call.1} parent=0
    #allocation2 [shape = 'u8[8192]{0}', space=vmem, size = 0x2000, scoped, tag = 'output window, operand 0, single buffered']
    #allocation3 [shape = 's32[1]{0}', space=sflag, size = 0x4, scoped, tag = 'scoped memory for tpu_custom_call.1']
    %8 = vsyncpa [#allocation3], 0
    // Predicated region
    $region2: #{tpu_custom_call.1} parent=1 // pred_check
      _
    $region3: #{tpu_custom_call.1} parent=1 // pred_check_branch
      %10 = sbr.rel (0) target = $region5
    $region4: #{tpu_custom_call.1} parent=1 // pred_region
      _
    $region5: #{tpu_custom_call.1} parent=1 // pred_fallthru
      _
    // Predicated region
    $region6: #{tpu_custom_call.1} parent=1 // pred_check
      _
    $region7: #{tpu_custom_call.1} parent=1 // pred_check_branch
      %12 = sbr.rel (0) target = $region9
    $region8: #{tpu_custom_call.1} parent=1 // pred_region
      _
    $region9: #{tpu_custom_call.1} parent=1 // pred_fallthru
      _
    // Predicated region
    $region10: #{tpu_custom_call.1} parent=1 // pred_check
      _
    $region11: #{tpu_custom_call.1} parent=1 // pred_check_branch
      %14 = sbr.rel (0) target = $region13
    $region12: #{tpu_custom_call.1} parent=1 // pred_region
      _
    $region13: #{tpu_custom_call.1} parent=1 // pred_fallthru
      _
    %s15 = smul.u32 0, 8
    %s16 = scalar_lea.vmem %s1, %s15
    %v17 = vld [vmem:[%s16] sm:$0xff]
    %s18 = scalar_lea.vmem %s2, %s15
    %v19 = vld [vmem:[%s18] sm:$0xff]
    %v20 = vld [vmem:[%s0] sm:$0xff]
    %v21 = vld [vmem:[%s0 + $0x8] sm:$0xff]
    %23 = vset.pattern.permute.xlu0 0
    %24 = vperm.xlu0 %23, %v17
    %v25 = vpop.permute.xlu0 %24
    %v27 = vsub.f32 %v20, %v25
    %v28 = vsub.f32 %v21, %v25
    %30 = vset.pattern.permute.xlu0 0
    %31 = vperm.xlu0 %30, %v19
    %v32 = vpop.permute.xlu0 %31
    %v34 = vmul.f32 %v27, %v32
    %v35 = vmul.f32 %v28, %v32
    %36 = vst [vmem:[#allocation2] sm:$0xff] %v34
    %37 = vst [vmem:[#allocation2 + $0x8] sm:$0xff] %v35
    // Predicated region
    $region14: #{tpu_custom_call.1} parent=1 // pred_check
      _
    $region15: #{tpu_custom_call.1} parent=1 // pred_check_branch
      %39 = sbr.rel (0) target = $region17
    $region16: #{tpu_custom_call.1} parent=1 // pred_region
      %41 = vsyncadd [#allocation3], 0
      %s43 = sshll.u32 [#allocation2], 4
      %s44 = int_to_ptr.vmem [resolvable:$true] %s43
      %s45 = sshll.u32 %s3, 4
      %s46 = int_to_ptr.hbm [resolvable:$true] %s45
      %48 = dma.vmem_to_hbm [thread:$0]  %s44, 256, %s46, [#allocation3]
    $region17: #{tpu_custom_call.1} parent=1 // pred_fallthru
      _
    // Predicated region
    $region18: #{tpu_custom_call.1} parent=1 // pred_check
      _
    $region19: #{tpu_custom_call.1} parent=1 // pred_check_branch
      %50 = sbr.rel (0) target = $region21
    $region20: #{tpu_custom_call.1} parent=1 // pred_region
      %52 = dma.done [#allocation3], 256
    $region21: #{tpu_custom_call.1} parent=1 // pred_fallthru
      _
    %53 = vsyncpa [#allocation3], 1

</llo_original>
